<compile_context>
chip_gen: v7x
topology: tpu7x:2x2x1
jax: 0.10.0
libtpu: 0.0.40
codegen_flags: <defaults>
</compile_context>

<pallas_src>
import functools

import jax
import jax.numpy as jnp
import numpy as np
from jax.experimental import pallas as pl
from jax.experimental.pallas import tpu as pltpu


def _rnn_kernel(x_ref, w_ref, b_ref, hid_ref, out_ref, *, T, B, Din, H, O):
    """Full RNN recurrence in a single kernel invocation.

    x_ref  : (T, B, Din)   time-major inputs (VMEM resident)
    w_ref  : (Din+H, H+O)  fused [i2h | h2o] weights, pre-transposed
    b_ref  : (1, H+O)      fused bias
    hid_ref: (B, T*H)      hiddens, already in torch.cat(hiddens, 1) layout
    out_ref: (B, T*O)      outputs, already in torch.cat(outputs, 1) layout
    """
    w = w_ref[...]                                      # hoisted: loaded once
    bias = jnp.broadcast_to(b_ref[...], (B, H + O))     # hoisted: one broadcast, not T

    h = jnp.zeros((B, H), jnp.float32)
    hid_chunks = []
    out_chunks = []
    # T is small and static: fully unroll the recurrence; all slices are static.
    for t in range(T):
        x = x_ref[t]                                    # (B, Din)
        inp = jnp.concatenate([x, h], axis=1)           # torch.cat((x, h), 1) -> (B, Din+H)
        z = jnp.dot(inp, w, preferred_element_type=jnp.float32) + bias  # one fused MXU matmul
        out_chunks.append(z[:, H:])                     # h2o(inp)       -- uses h_{t-1}
        h = jnp.tanh(z[:, :H])                          # tanh(i2h(inp)) -- new hidden
        hid_chunks.append(h)

    # Two lane-dense stores of the full output slabs (no masked per-step stores).
    hid_ref[...] = jnp.concatenate(hid_chunks, axis=1).astype(hid_ref.dtype)
    out_ref[...] = jnp.concatenate(out_chunks, axis=1).astype(out_ref.dtype)


@jax.jit
def rnn_get_output(X, w_i2h, b_i2h, w_h2o, b_h2o):
    """X: (T, B, Din) f32. Weights in PyTorch nn.Linear layout:
         w_i2h: (H, Din+H), b_i2h: (H,), w_h2o: (O, Din+H), b_h2o: (O,).
       Returns (hiddens_cat (B, T*H), outputs_cat (B, T*O)) == RNN.get_output."""
    T, B, Din = X.shape
    H = w_i2h.shape[0]
    O = w_h2o.shape[0]

    # Fuse the two Linear layers:  [x, h] @ [W_i2h.T | W_h2o.T] + [b_i2h | b_h2o]
    W = jnp.concatenate([w_i2h.T, w_h2o.T], axis=1).astype(jnp.float32)       # (Din+H, H+O)
    b = jnp.concatenate([b_i2h, b_h2o]).reshape(1, H + O).astype(jnp.float32)  # (1, H+O)

    kernel = functools.partial(_rnn_kernel, T=T, B=B, Din=Din, H=H, O=O)
    vmem = pl.BlockSpec(memory_space=pltpu.MemorySpace.VMEM)  # untiled VMEM resident

    hid_cat, out_cat = pl.pallas_call(
        kernel,
        out_shape=(jax.ShapeDtypeStruct((B, T * H), jnp.float32),
                   jax.ShapeDtypeStruct((B, T * O), jnp.float32)),
        in_specs=[vmem, vmem, vmem],
        out_specs=(vmem, vmem),
    )(X, W, b)
    return hid_cat, out_cat


def _reference(X, w_i2h, b_i2h, w_h2o, b_h2o):
    """Pure-numpy reference mirroring the PyTorch loop exactly."""
    X = np.asarray(X, np.float32)
    w_i2h = np.asarray(w_i2h); b_i2h = np.asarray(b_i2h)
    w_h2o = np.asarray(w_h2o); b_h2o = np.asarray(b_h2o)
    T, B, _ = X.shape
    H = w_i2h.shape[0]
    h = np.zeros((B, H), np.float32)
    hids, outs = [], []
    for t in range(T):
        inp = np.concatenate([X[t], h], axis=1)
        out = inp @ w_h2o.T + b_h2o          # h2o(inp)  (uses previous hidden)
        h = np.tanh(inp @ w_i2h.T + b_i2h)   # tanh(i2h(inp))
        hids.append(h)
        outs.append(out)
    return np.concatenate(hids, 1), np.concatenate(outs, 1)


if __name__ == "__main__":
    # Small deterministic shapes consistent with the module's forward.
    T, B = 8, 2                              # time steps, batch
    input_size, hidden_size, output_size = 4, 32, 4
    fan_in = input_size + hidden_size
    bound = 1.0 / np.sqrt(fan_in)

    key = jax.random.PRNGKey(0)
    ks = jax.random.split(key, 5)

    # nn.Linear(input_size + hidden_size, hidden_size / output_size) parameters.
    w_i2h = jax.random.uniform(ks[0], (hidden_size, fan_in), jnp.float32, -bound, bound)
    b_i2h = jax.random.uniform(ks[1], (hidden_size,), jnp.float32, -bound, bound)
    w_h2o = jax.random.uniform(ks[2], (output_size, fan_in), jnp.float32, -bound, bound)
    b_h2o = jax.random.uniform(ks[3], (output_size,), jnp.float32, -bound, bound)

    # Time-major input, matching X[t] -> (B, Din) in PyTorch's get_output.
    X = jax.random.normal(ks[4], (T, B, input_size), jnp.float32)

    hid_cat, out_cat = rnn_get_output(X, w_i2h, b_i2h, w_h2o, b_h2o)
    jax.block_until_ready((hid_cat, out_cat))

    ref_hid, ref_out = _reference(X, w_i2h, b_i2h, w_h2o, b_h2o)
    np.testing.assert_allclose(np.asarray(hid_cat), ref_hid, rtol=1e-5, atol=1e-5)
    np.testing.assert_allclose(np.asarray(out_cat), ref_out, rtol=1e-5, atol=1e-5)

    print("KERNEL_OK")
</pallas_src>

<mosaic_0001>
module attributes {stable_mosaic.version = 11 : i64} {
  func.func @_rnn_kernel(%arg0: memref<8x2x4xf32, #tpu.memory_space<vmem>>, %arg1: memref<36x36xf32, #tpu.memory_space<vmem>>, %arg2: memref<1x36xf32, #tpu.memory_space<vmem>>, %arg3: memref<2x256xf32, #tpu.memory_space<vmem>>, %arg4: memref<2x32xf32, #tpu.memory_space<vmem>>) attributes {dimension_semantics = [], scalar_prefetch = 0 : i64, scratch_operands = 0 : i64, tpu.core_type = #tpu.core_type<tc>} {
    %c0 = arith.constant 0 : index
    %c0_0 = arith.constant 0 : index
    %0 = vector.load %arg1[%c0, %c0_0] : memref<36x36xf32, #tpu.memory_space<vmem>>, vector<36x36xf32>
    %c0_1 = arith.constant 0 : index
    %c0_2 = arith.constant 0 : index
    %1 = vector.load %arg2[%c0_1, %c0_2] : memref<1x36xf32, #tpu.memory_space<vmem>>, vector<1x36xf32>
    %2 = vector.shape_cast %1 : vector<1x36xf32> to vector<1x36xf32>
    %3 = vector.broadcast %2 : vector<1x36xf32> to vector<2x36xf32>
    %cst = arith.constant 0.000000e+00 : f32
    %4 = vector.broadcast %cst : f32 to vector<2x32xf32>
    %c0_3 = arith.constant 0 : index
    %c0_4 = arith.constant 0 : index
    %c0_5 = arith.constant 0 : index
    %5 = vector.load %arg0[%c0_3, %c0_4, %c0_5] : memref<8x2x4xf32, #tpu.memory_space<vmem>>, vector<1x2x4xf32>
    %6 = vector.shape_cast %5 : vector<1x2x4xf32> to vector<2x4xf32>
    %7 = tpu.concatenate %6, %4 in 1 : vector<2x4xf32>, vector<2x32xf32> -> vector<2x36xf32>
    %cst_6 = arith.constant dense<0.000000e+00> : vector<2x36xf32>
    %8 = tpu.matmul %7, %0, %cst_6 {dimension_numbers = #tpu.dot_dimension_numbers<[1], [0], [0], [1], [0, 0, 1, 1], [], []>} : vector<2x36xf32>, vector<36x36xf32>, vector<2x36xf32> -> vector<2x36xf32>
    %9 = arith.addf %8, %3 : vector<2x36xf32>
    %10 = vector.extract_strided_slice %9 {offsets = [0, 32], sizes = [2, 4], strides = [1, 1]} : vector<2x36xf32> to vector<2x4xf32>
    %11 = vector.extract_strided_slice %9 {offsets = [0, 0], sizes = [2, 32], strides = [1, 1]} : vector<2x36xf32> to vector<2x32xf32>
    %12 = math.tanh %11 : vector<2x32xf32>
    %c1 = arith.constant 1 : index
    %c0_7 = arith.constant 0 : index
    %c0_8 = arith.constant 0 : index
    %13 = vector.load %arg0[%c1, %c0_7, %c0_8] : memref<8x2x4xf32, #tpu.memory_space<vmem>>, vector<1x2x4xf32>
    %14 = vector.shape_cast %13 : vector<1x2x4xf32> to vector<2x4xf32>
    %15 = tpu.concatenate %14, %12 in 1 : vector<2x4xf32>, vector<2x32xf32> -> vector<2x36xf32>
    %cst_9 = arith.constant dense<0.000000e+00> : vector<2x36xf32>
    %16 = tpu.matmul %15, %0, %cst_9 {dimension_numbers = #tpu.dot_dimension_numbers<[1], [0], [0], [1], [0, 0, 1, 1], [], []>} : vector<2x36xf32>, vector<36x36xf32>, vector<2x36xf32> -> vector<2x36xf32>
    %17 = arith.addf %16, %3 : vector<2x36xf32>
    %18 = vector.extract_strided_slice %17 {offsets = [0, 32], sizes = [2, 4], strides = [1, 1]} : vector<2x36xf32> to vector<2x4xf32>
    %19 = vector.extract_strided_slice %17 {offsets = [0, 0], sizes = [2, 32], strides = [1, 1]} : vector<2x36xf32> to vector<2x32xf32>
    %20 = math.tanh %19 : vector<2x32xf32>
    %c2 = arith.constant 2 : index
    %c0_10 = arith.constant 0 : index
    %c0_11 = arith.constant 0 : index
    %21 = vector.load %arg0[%c2, %c0_10, %c0_11] : memref<8x2x4xf32, #tpu.memory_space<vmem>>, vector<1x2x4xf32>
    %22 = vector.shape_cast %21 : vector<1x2x4xf32> to vector<2x4xf32>
    %23 = tpu.concatenate %22, %20 in 1 : vector<2x4xf32>, vector<2x32xf32> -> vector<2x36xf32>
    %cst_12 = arith.constant dense<0.000000e+00> : vector<2x36xf32>
    %24 = tpu.matmul %23, %0, %cst_12 {dimension_numbers = #tpu.dot_dimension_numbers<[1], [0], [0], [1], [0, 0, 1, 1], [], []>} : vector<2x36xf32>, vector<36x36xf32>, vector<2x36xf32> -> vector<2x36xf32>
    %25 = arith.addf %24, %3 : vector<2x36xf32>
    %26 = vector.extract_strided_slice %25 {offsets = [0, 32], sizes = [2, 4], strides = [1, 1]} : vector<2x36xf32> to vector<2x4xf32>
    %27 = vector.extract_strided_slice %25 {offsets = [0, 0], sizes = [2, 32], strides = [1, 1]} : vector<2x36xf32> to vector<2x32xf32>
    %28 = math.tanh %27 : vector<2x32xf32>
    %c3 = arith.constant 3 : index
    %c0_13 = arith.constant 0 : index
    %c0_14 = arith.constant 0 : index
    %29 = vector.load %arg0[%c3, %c0_13, %c0_14] : memref<8x2x4xf32, #tpu.memory_space<vmem>>, vector<1x2x4xf32>
    %30 = vector.shape_cast %29 : vector<1x2x4xf32> to vector<2x4xf32>
    %31 = tpu.concatenate %30, %28 in 1 : vector<2x4xf32>, vector<2x32xf32> -> vector<2x36xf32>
    %cst_15 = arith.constant dense<0.000000e+00> : vector<2x36xf32>
    %32 = tpu.matmul %31, %0, %cst_15 {dimension_numbers = #tpu.dot_dimension_numbers<[1], [0], [0], [1], [0, 0, 1, 1], [], []>} : vector<2x36xf32>, vector<36x36xf32>, vector<2x36xf32> -> vector<2x36xf32>
    %33 = arith.addf %32, %3 : vector<2x36xf32>
    %34 = vector.extract_strided_slice %33 {offsets = [0, 32], sizes = [2, 4], strides = [1, 1]} : vector<2x36xf32> to vector<2x4xf32>
    %35 = vector.extract_strided_slice %33 {offsets = [0, 0], sizes = [2, 32], strides = [1, 1]} : vector<2x36xf32> to vector<2x32xf32>
    %36 = math.tanh %35 : vector<2x32xf32>
    %c4 = arith.constant 4 : index
    %c0_16 = arith.constant 0 : index
    %c0_17 = arith.constant 0 : index
    %37 = vector.load %arg0[%c4, %c0_16, %c0_17] : memref<8x2x4xf32, #tpu.memory_space<vmem>>, vector<1x2x4xf32>
    %38 = vector.shape_cast %37 : vector<1x2x4xf32> to vector<2x4xf32>
    %39 = tpu.concatenate %38, %36 in 1 : vector<2x4xf32>, vector<2x32xf32> -> vector<2x36xf32>
    %cst_18 = arith.constant dense<0.000000e+00> : vector<2x36xf32>
    %40 = tpu.matmul %39, %0, %cst_18 {dimension_numbers = #tpu.dot_dimension_numbers<[1], [0], [0], [1], [0, 0, 1, 1], [], []>} : vector<2x36xf32>, vector<36x36xf32>, vector<2x36xf32> -> vector<2x36xf32>
    %41 = arith.addf %40, %3 : vector<2x36xf32>
    %42 = vector.extract_strided_slice %41 {offsets = [0, 32], sizes = [2, 4], strides = [1, 1]} : vector<2x36xf32> to vector<2x4xf32>
    %43 = vector.extract_strided_slice %41 {offsets = [0, 0], sizes = [2, 32], strides = [1, 1]} : vector<2x36xf32> to vector<2x32xf32>
    %44 = math.tanh %43 : vector<2x32xf32>
    %c5 = arith.constant 5 : index
    %c0_19 = arith.constant 0 : index
    %c0_20 = arith.constant 0 : index
    %45 = vector.load %arg0[%c5, %c0_19, %c0_20] : memref<8x2x4xf32, #tpu.memory_space<vmem>>, vector<1x2x4xf32>
    %46 = vector.shape_cast %45 : vector<1x2x4xf32> to vector<2x4xf32>
    %47 = tpu.concatenate %46, %44 in 1 : vector<2x4xf32>, vector<2x32xf32> -> vector<2x36xf32>
    %cst_21 = arith.constant dense<0.000000e+00> : vector<2x36xf32>
    %48 = tpu.matmul %47, %0, %cst_21 {dimension_numbers = #tpu.dot_dimension_numbers<[1], [0], [0], [1], [0, 0, 1, 1], [], []>} : vector<2x36xf32>, vector<36x36xf32>, vector<2x36xf32> -> vector<2x36xf32>
    %49 = arith.addf %48, %3 : vector<2x36xf32>
    %50 = vector.extract_strided_slice %49 {offsets = [0, 32], sizes = [2, 4], strides = [1, 1]} : vector<2x36xf32> to vector<2x4xf32>
    %51 = vector.extract_strided_slice %49 {offsets = [0, 0], sizes = [2, 32], strides = [1, 1]} : vector<2x36xf32> to vector<2x32xf32>
    %52 = math.tanh %51 : vector<2x32xf32>
    %c6 = arith.constant 6 : index
    %c0_22 = arith.constant 0 : index
    %c0_23 = arith.constant 0 : index
    %53 = vector.load %arg0[%c6, %c0_22, %c0_23] : memref<8x2x4xf32, #tpu.memory_space<vmem>>, vector<1x2x4xf32>
    %54 = vector.shape_cast %53 : vector<1x2x4xf32> to vector<2x4xf32>
    %55 = tpu.concatenate %54, %52 in 1 : vector<2x4xf32>, vector<2x32xf32> -> vector<2x36xf32>
    %cst_24 = arith.constant dense<0.000000e+00> : vector<2x36xf32>
    %56 = tpu.matmul %55, %0, %cst_24 {dimension_numbers = #tpu.dot_dimension_numbers<[1], [0], [0], [1], [0, 0, 1, 1], [], []>} : vector<2x36xf32>, vector<36x36xf32>, vector<2x36xf32> -> vector<2x36xf32>
    %57 = arith.addf %56, %3 : vector<2x36xf32>
    %58 = vector.extract_strided_slice %57 {offsets = [0, 32], sizes = [2, 4], strides = [1, 1]} : vector<2x36xf32> to vector<2x4xf32>
    %59 = vector.extract_strided_slice %57 {offsets = [0, 0], sizes = [2, 32], strides = [1, 1]} : vector<2x36xf32> to vector<2x32xf32>
    %60 = math.tanh %59 : vector<2x32xf32>
    %c7 = arith.constant 7 : index
    %c0_25 = arith.constant 0 : index
    %c0_26 = arith.constant 0 : index
    %61 = vector.load %arg0[%c7, %c0_25, %c0_26] : memref<8x2x4xf32, #tpu.memory_space<vmem>>, vector<1x2x4xf32>
    %62 = vector.shape_cast %61 : vector<1x2x4xf32> to vector<2x4xf32>
    %63 = tpu.concatenate %62, %60 in 1 : vector<2x4xf32>, vector<2x32xf32> -> vector<2x36xf32>
    %cst_27 = arith.constant dense<0.000000e+00> : vector<2x36xf32>
    %64 = tpu.matmul %63, %0, %cst_27 {dimension_numbers = #tpu.dot_dimension_numbers<[1], [0], [0], [1], [0, 0, 1, 1], [], []>} : vector<2x36xf32>, vector<36x36xf32>, vector<2x36xf32> -> vector<2x36xf32>
    %65 = arith.addf %64, %3 : vector<2x36xf32>
    %66 = vector.extract_strided_slice %65 {offsets = [0, 32], sizes = [2, 4], strides = [1, 1]} : vector<2x36xf32> to vector<2x4xf32>
    %67 = vector.extract_strided_slice %65 {offsets = [0, 0], sizes = [2, 32], strides = [1, 1]} : vector<2x36xf32> to vector<2x32xf32>
    %68 = math.tanh %67 : vector<2x32xf32>
    %69 = tpu.concatenate %12, %20, %28, %36, %44, %52, %60, %68 in 1 : vector<2x32xf32>, vector<2x32xf32>, vector<2x32xf32>, vector<2x32xf32>, vector<2x32xf32>, vector<2x32xf32>, vector<2x32xf32>, vector<2x32xf32> -> vector<2x256xf32>
    %c0_28 = arith.constant 0 : index
    %c0_29 = arith.constant 0 : index
    %70 = vector.load %arg3[%c0_28, %c0_29] : memref<2x256xf32, #tpu.memory_space<vmem>>, vector<2x256xf32>
    tpu.vector_store %arg3[%c0_28, %c0_29], %69 {strides = array<i32>} : memref<2x256xf32, #tpu.memory_space<vmem>>, vector<2x256xf32>,
    %71 = tpu.concatenate %10, %18, %26, %34, %42, %50, %58, %66 in 1 : vector<2x4xf32>, vector<2x4xf32>, vector<2x4xf32>, vector<2x4xf32>, vector<2x4xf32>, vector<2x4xf32>, vector<2x4xf32>, vector<2x4xf32> -> vector<2x32xf32>
    %c0_30 = arith.constant 0 : index
    %c0_31 = arith.constant 0 : index
    %72 = vector.load %arg4[%c0_30, %c0_31] : memref<2x32xf32, #tpu.memory_space<vmem>>, vector<2x32xf32>
    tpu.vector_store %arg4[%c0_30, %c0_31], %71 {strides = array<i32>} : memref<2x32xf32, #tpu.memory_space<vmem>>, vector<2x32xf32>,
    return
  }
}

</mosaic_0001>

<llo_original>
// kernel: rnn_get_output.1
$region0: #{rnn_get_output.1}
  #allocation0 [shape = 'u32[]', space=smem, size = 0x4, offset = 0x4, fixed_abs, tag = 'smem constant byte address 0x4 - core index']
  #allocation1 [shape = 'u32[144,128]{1,0:T(1,128)}', space=vmem, size = 0x12000, scoped, tag = 'internal scratch']
  %s0 = inlined_call_operand.vmem [shape: f32[8,2,4], index: 0, kind: input, shape index: {}]
  %s1 = inlined_call_operand.vmem [shape: f32[36,36], index: 1, kind: input, shape index: {}]
  %s2 = inlined_call_operand.vmem [shape: f32[1,36], index: 2, kind: input, shape index: {}]
  %s3 = inlined_call_operand.hbm [shape: f32[2,256], index: 3, kind: output, shape index: {0}]
  %s4 = inlined_call_operand.hbm [shape: f32[2,32], index: 4, kind: output, shape index: {1}]
  %5 = xla_tuple %s3, %s4
  %s6 = sld [smem:[#allocation0]]
  $region30: #{rnn_get_output.1} parent=0
    _
  %s8 = ssub.s32 1, %s6
  %s9 = scalar_select 0, %s8, %s6
  $region1: #{rnn_get_output.1} parent=0
    #allocation2 [shape = 'u8[2048]{0}', space=vmem, size = 0x800, scoped, tag = 'output window, operand 0, single buffered']
    #allocation3 [shape = 's32[1]{0}', space=sflag, size = 0x4, scoped, tag = 'scoped memory for rnn_get_output.1']
    #allocation4 [shape = 'u8[1024]{0}', space=vmem, size = 0x400, scoped, tag = 'output window, operand 1, single buffered']
    #allocation5 [shape = 's32[1]{0}', space=sflag, size = 0x4, scoped, tag = 'scoped memory for rnn_get_output.1']
    %10 = vsyncpa [#allocation3], 0
    %11 = vsyncpa [#allocation5], 0
    // Predicated region
    $region2: #{rnn_get_output.1} parent=1 // pred_check
      _
    $region3: #{rnn_get_output.1} parent=1 // pred_check_branch
      %13 = sbr.rel (0) target = $region5
    $region4: #{rnn_get_output.1} parent=1 // pred_region
      _
    $region5: #{rnn_get_output.1} parent=1 // pred_fallthru
      _
    // Predicated region
    $region6: #{rnn_get_output.1} parent=1 // pred_check
      _
    $region7: #{rnn_get_output.1} parent=1 // pred_check_branch
      %15 = sbr.rel (0) target = $region9
    $region8: #{rnn_get_output.1} parent=1 // pred_region
      _
    $region9: #{rnn_get_output.1} parent=1 // pred_fallthru
      _
    // Predicated region
    $region10: #{rnn_get_output.1} parent=1 // pred_check
      _
    $region11: #{rnn_get_output.1} parent=1 // pred_check_branch
      %17 = sbr.rel (0) target = $region13
    $region12: #{rnn_get_output.1} parent=1 // pred_region
      _
    $region13: #{rnn_get_output.1} parent=1 // pred_fallthru
      _
    %v18 = vld [vmem:[%s1] sm:$0xff]
    %v19 = vld [vmem:[%s1 + $0x8] sm:$0xff]
    %v20 = vld [vmem:[%s1 + $0x10] sm:$0xff]
    %v21 = vld [vmem:[%s1 + $0x18] sm:$0xff]
    %v22 = vld [vmem:[%s1 + $0x20] sm:$0xf]
    %v23 = vld [vmem:[%s2] sm:$0x1]
    %v25 = vlaneseq
    %v26 = vshrl.u32 %v25, 7
    %v27 = vsub.s32 0, %v26
    %v28 = vrot.slane %v23, %v27
    %v30 = vld [vmem:[%s0] sm:$0x3]
    %vm31 = vcmask 31744
    %v32 = vsel %vm31, %v30, 0.0
    %vm33 = vcmask 293888
    %v35 = vsel %vm33, %v32, 0
    %vm37 = vcmask 1043456
    %v39 = vsel %vm37, %v22, 0
    %41 = vmatprep.subr.mxu0 0.0
    %42 = vmatpush1.msra.mxu0 %v18
    %43 = vmatprep.subr.mxu0 0.0
    %44 = vmatpush1.msra.mxu0 %v19
    %45 = vmatprep.subr.mxu0 0.0
    %46 = vmatpush1.msra.mxu0 %v20
    %47 = vmatprep.subr.mxu0 0.0
    %48 = vmatpush1.msra.mxu0 %v21
    %49 = vmatprep.subr.mxu0 0.0
    %50 = vmatpush1.msra.mxu0 %v39
    %51 = vmatprep.subr.mxu0 0.0
    %52 = vmatpush1.msra.mxu0 0.0
    %53 = vmatprep.subr.mxu0 0.0
    %54 = vmatpush1.msra.mxu0 0.0
    %55 = vmatprep.subr.mxu0 0.0
    %56 = vmatpush1.msra.mxu0 0.0
    %57 = vmatprep.subr.mxu0 0.0
    %58 = vmatpush1.msra.mxu0 0.0
    %59 = vmatprep.subr.mxu0 0.0
    %60 = vmatpush1.msra.mxu0 0.0
    %61 = vmatprep.subr.mxu0 0.0
    %62 = vmatpush1.msra.mxu0 0.0
    %63 = vmatprep.subr.mxu0 0.0
    %64 = vmatpush1.msra.mxu0 0.0
    %65 = vmatprep.subr.mxu0 0.0
    %66 = vmatpush1.msra.mxu0 0.0
    %67 = vmatprep.subr.mxu0 0.0
    %68 = vmatpush1.msra.mxu0 0.0
    %69 = vmatprep.subr.mxu0 0.0
    %70 = vmatpush1.msra.mxu0 0.0
    %71 = vmatprep.subr.mxu0 0.0
    %72 = vmatpush1.msra.mxu0 0.0
    %73 = vmatprep.subr.mxu0 0.0
    %74 = vmatpush1.msra.mxu0 0.0
    %75 = vmatprep.subr.mxu0 0.0
    %76 = vmatpush1.msra.mxu0 0.0
    %77 = vmatprep.subr.mxu0 0.0
    %78 = vmatpush1.msra.mxu0 0.0
    %79 = vmatprep.subr.mxu0 0.0
    %80 = vmatpush1.msra.mxu0 0.0
    %81 = vmatprep.subr.mxu0 0.0
    %82 = vmatpush1.msra.mxu0 0.0
    %83 = vmatprep.subr.mxu0 0.0
    %84 = vmatpush1.msra.mxu0 0.0
    %85 = vmatprep.subr.mxu0 0.0
    %86 = vmatpush1.msra.mxu0 0.0
    %87 = vmatprep.subr.mxu0 0.0
    %88 = vmatpush1.msra.mxu0 0.0
    %89 = vmatprep.subr.mxu0 0.0
    %90 = vmatpush1.msra.mxu0 0.0
    %91 = vmatprep.subr.mxu0 0.0
    %92 = vmatpush1.msra.mxu0 0.0
    %93 = vmatprep.subr.mxu0 0.0
    %94 = vmatpush1.msra.mxu0 0.0
    %95 = vmatprep.subr.mxu0 0.0
    %96 = vmatpush1.msra.mxu0 0.0
    %97 = vmatprep.subr.mxu0 0.0
    %98 = vmatpush1.msra.mxu0 0.0
    %99 = vmatprep.subr.mxu0 0.0
    %100 = vmatpush1.msra.mxu0 0.0
    %101 = vmatprep.subr.mxu0 0.0
    %102 = vmatpush1.msra.mxu0 0.0
    %103 = vmatprep.subr.mxu0 0.0
    %104 = vmatpush1.msra.mxu0 0.0
    %105 = vmatprep.mubr.f32.mxu0 0.0
    %106 = vmatmul.mubr.f32.gmra.mrb[0].mxu0 %v35
    %v107 = vpop.f32.mrb[0].mxu0
    %v108 = vadd.f32 %v28, %v107
    %v109 = vpop.f32.mrb[0].mxu0
    %110 = vdwg.mxu0
    %v111 = vtanh.pop %v108
    %s112 = scalar_lea.vmem %s0, 2
    %v113 = vld [vmem:[%s112] sm:$0x3]
    %115 = vrot.lane.b32.xlu0 %v111, 4
    %v116 = vpop.permute.xlu0 %115
    %v118 = vsel %vm31, %v113, %v116
    %v120 = vsel %vm33, %v118, 0
    %122 = vmatprep.subr.mxu0 0.0
    %123 = vmatpush1.msra.mxu0 %v18
    %124 = vmatprep.subr.mxu0 0.0
    %125 = vmatpush1.msra.mxu0 %v19
    %126 = vmatprep.subr.mxu0 0.0
    %127 = vmatpush1.msra.mxu0 %v20
    %128 = vmatprep.subr.mxu0 0.0
    %129 = vmatpush1.msra.mxu0 %v21
    %130 = vmatprep.subr.mxu0 0.0
    %131 = vmatpush1.msra.mxu0 %v39
    %132 = vmatprep.subr.mxu0 0.0
    %133 = vmatpush1.msra.mxu0 0.0
    %134 = vmatprep.subr.mxu0 0.0
    %135 = vmatpush1.msra.mxu0 0.0
    %136 = vmatprep.subr.mxu0 0.0
    %137 = vmatpush1.msra.mxu0 0.0
    %138 = vmatprep.subr.mxu0 0.0
    %139 = vmatpush1.msra.mxu0 0.0
    %140 = vmatprep.subr.mxu0 0.0
    %141 = vmatpush1.msra.mxu0 0.0
    %142 = vmatprep.subr.mxu0 0.0
    %143 = vmatpush1.msra.mxu0 0.0
    %144 = vmatprep.subr.mxu0 0.0
    %145 = vmatpush1.msra.mxu0 0.0
    %146 = vmatprep.subr.mxu0 0.0
    %147 = vmatpush1.msra.mxu0 0.0
    %148 = vmatprep.subr.mxu0 0.0
    %149 = vmatpush1.msra.mxu0 0.0
    %150 = vmatprep.subr.mxu0 0.0
    %151 = vmatpush1.msra.mxu0 0.0
    %152 = vmatprep.subr.mxu0 0.0
    %153 = vmatpush1.msra.mxu0 0.0
    %154 = vmatprep.subr.mxu0 0.0
    %155 = vmatpush1.msra.mxu0 0.0
    %156 = vmatprep.subr.mxu0 0.0
    %157 = vmatpush1.msra.mxu0 0.0
    %158 = vmatprep.subr.mxu0 0.0
    %159 = vmatpush1.msra.mxu0 0.0
    %160 = vmatprep.subr.mxu0 0.0
    %161 = vmatpush1.msra.mxu0 0.0
    %162 = vmatprep.subr.mxu0 0.0
    %163 = vmatpush1.msra.mxu0 0.0
    %164 = vmatprep.subr.mxu0 0.0
    %165 = vmatpush1.msra.mxu0 0.0
    %166 = vmatprep.subr.mxu0 0.0
    %167 = vmatpush1.msra.mxu0 0.0
    %168 = vmatprep.subr.mxu0 0.0
    %169 = vmatpush1.msra.mxu0 0.0
    %170 = vmatprep.subr.mxu0 0.0
    %171 = vmatpush1.msra.mxu0 0.0
    %172 = vmatprep.subr.mxu0 0.0
    %173 = vmatpush1.msra.mxu0 0.0
    %174 = vmatprep.subr.mxu0 0.0
    %175 = vmatpush1.msra.mxu0 0.0
    %176 = vmatprep.subr.mxu0 0.0
    %177 = vmatpush1.msra.mxu0 0.0
    %178 = vmatprep.subr.mxu0 0.0
    %179 = vmatpush1.msra.mxu0 0.0
    %180 = vmatprep.subr.mxu0 0.0
    %181 = vmatpush1.msra.mxu0 0.0
    %182 = vmatprep.subr.mxu0 0.0
    %183 = vmatpush1.msra.mxu0 0.0
    %184 = vmatprep.subr.mxu0 0.0
    %185 = vmatpush1.msra.mxu0 0.0
    %186 = vmatprep.mubr.f32.mxu0 0.0
    %187 = vmatmul.mubr.f32.gmra.mrb[0].mxu0 %v120
    %v188 = vpop.f32.mrb[0].mxu0
    %v189 = vadd.f32 %v28, %v188
    %v190 = vpop.f32.mrb[0].mxu0
    %191 = vdwg.mxu0
    %v192 = vtanh.pop %v189
    %s193 = scalar_lea.vmem %s0, 4
    %v194 = vld [vmem:[%s193] sm:$0x3]
    %196 = vrot.lane.b32.xlu0 %v192, 4
    %v197 = vpop.permute.xlu0 %196
    %v199 = vsel %vm31, %v194, %v197
    %v201 = vsel %vm33, %v199, 0
    %203 = vmatprep.subr.mxu0 0.0
    %204 = vmatpush1.msra.mxu0 %v18
    %205 = vmatprep.subr.mxu0 0.0
    %206 = vmatpush1.msra.mxu0 %v19
    %207 = vmatprep.subr.mxu0 0.0
    %208 = vmatpush1.msra.mxu0 %v20
    %209 = vmatprep.subr.mxu0 0.0
    %210 = vmatpush1.msra.mxu0 %v21
    %211 = vmatprep.subr.mxu0 0.0
    %212 = vmatpush1.msra.mxu0 %v39
    %213 = vmatprep.subr.mxu0 0.0
    %214 = vmatpush1.msra.mxu0 0.0
    %215 = vmatprep.subr.mxu0 0.0
    %216 = vmatpush1.msra.mxu0 0.0
    %217 = vmatprep.subr.mxu0 0.0
    %218 = vmatpush1.msra.mxu0 0.0
    %219 = vmatprep.subr.mxu0 0.0
    %220 = vmatpush1.msra.mxu0 0.0
    %221 = vmatprep.subr.mxu0 0.0
    %222 = vmatpush1.msra.mxu0 0.0
    %223 = vmatprep.subr.mxu0 0.0
    %224 = vmatpush1.msra.mxu0 0.0
    %225 = vmatprep.subr.mxu0 0.0
    %226 = vmatpush1.msra.mxu0 0.0
    %227 = vmatprep.subr.mxu0 0.0
    %228 = vmatpush1.msra.mxu0 0.0
    %229 = vmatprep.subr.mxu0 0.0
    %230 = vmatpush1.msra.mxu0 0.0
    %231 = vmatprep.subr.mxu0 0.0
    %232 = vmatpush1.msra.mxu0 0.0
    %233 = vmatprep.subr.mxu0 0.0
    %234 = vmatpush1.msra.mxu0 0.0
    %235 = vmatprep.subr.mxu0 0.0
    %236 = vmatpush1.msra.mxu0 0.0
    %237 = vmatprep.subr.mxu0 0.0
    %238 = vmatpush1.msra.mxu0 0.0
    %239 = vmatprep.subr.mxu0 0.0
    %240 = vmatpush1.msra.mxu0 0.0
    %241 = vmatprep.subr.mxu0 0.0
    %242 = vmatpush1.msra.mxu0 0.0
    %243 = vmatprep.subr.mxu0 0.0
    %244 = vmatpush1.msra.mxu0 0.0
    %245 = vmatprep.subr.mxu0 0.0
    %246 = vmatpush1.msra.mxu0 0.0
    %247 = vmatprep.subr.mxu0 0.0
    %248 = vmatpush1.msra.mxu0 0.0
    %249 = vmatprep.subr.mxu0 0.0
    %250 = vmatpush1.msra.mxu0 0.0
    %251 = vmatprep.subr.mxu0 0.0
    %252 = vmatpush1.msra.mxu0 0.0
    %253 = vmatprep.subr.mxu0 0.0
    %254 = vmatpush1.msra.mxu0 0.0
    %255 = vmatprep.subr.mxu0 0.0
    %256 = vmatpush1.msra.mxu0 0.0
    %257 = vmatprep.subr.mxu0 0.0
    %258 = vmatpush1.msra.mxu0 0.0
    %259 = vmatprep.subr.mxu0 0.0
    %260 = vmatpush1.msra.mxu0 0.0
    %261 = vmatprep.subr.mxu0 0.0
    %262 = vmatpush1.msra.mxu0 0.0
    %263 = vmatprep.subr.mxu0 0.0
    %264 = vmatpush1.msra.mxu0 0.0
    %265 = vmatprep.subr.mxu0 0.0
    %266 = vmatpush1.msra.mxu0 0.0
    %267 = vmatprep.mubr.f32.mxu0 0.0
    %268 = vmatmul.mubr.f32.gmra.mrb[0].mxu0 %v201
    %v269 = vpop.f32.mrb[0].mxu0
    %v270 = vadd.f32 %v28, %v269
    %v271 = vpop.f32.mrb[0].mxu0
    %272 = vdwg.mxu0
    %v273 = vtanh.pop %v270
    %s274 = scalar_lea.vmem %s0, 6
    %v275 = vld [vmem:[%s274] sm:$0x3]
    %277 = vrot.lane.b32.xlu0 %v273, 4
    %v278 = vpop.permute.xlu0 %277
    %v280 = vsel %vm31, %v275, %v278
    %v282 = vsel %vm33, %v280, 0
    %284 = vmatprep.subr.mxu0 0.0
    %285 = vmatpush1.msra.mxu0 %v18
    %286 = vmatprep.subr.mxu0 0.0
    %287 = vmatpush1.msra.mxu0 %v19
    %288 = vmatprep.subr.mxu0 0.0
    %289 = vmatpush1.msra.mxu0 %v20
    %290 = vmatprep.subr.mxu0 0.0
    %291 = vmatpush1.msra.mxu0 %v21
    %292 = vmatprep.subr.mxu0 0.0
    %293 = vmatpush1.msra.mxu0 %v39
    %294 = vmatprep.subr.mxu0 0.0
    %295 = vmatpush1.msra.mxu0 0.0
    %296 = vmatprep.subr.mxu0 0.0
    %297 = vmatpush1.msra.mxu0 0.0
    %298 = vmatprep.subr.mxu0 0.0
    %299 = vmatpush1.msra.mxu0 0.0
    %300 = vmatprep.subr.mxu0 0.0
    %301 = vmatpush1.msra.mxu0 0.0
    %302 = vmatprep.subr.mxu0 0.0
    %303 = vmatpush1.msra.mxu0 0.0
    %304 = vmatprep.subr.mxu0 0.0
    %305 = vmatpush1.msra.mxu0 0.0
    %306 = vmatprep.subr.mxu0 0.0
    %307 = vmatpush1.msra.mxu0 0.0
    %308 = vmatprep.subr.mxu0 0.0
    %309 = vmatpush1.msra.mxu0 0.0
    %310 = vmatprep.subr.mxu0 0.0
    %311 = vmatpush1.msra.mxu0 0.0
    %312 = vmatprep.subr.mxu0 0.0
    %313 = vmatpush1.msra.mxu0 0.0
    %314 = vmatprep.subr.mxu0 0.0
    %315 = vmatpush1.msra.mxu0 0.0
    %316 = vmatprep.subr.mxu0 0.0
    %317 = vmatpush1.msra.mxu0 0.0
    %318 = vmatprep.subr.mxu0 0.0
    %319 = vmatpush1.msra.mxu0 0.0
    %320 = vmatprep.subr.mxu0 0.0
    %321 = vmatpush1.msra.mxu0 0.0
    %322 = vmatprep.subr.mxu0 0.0
    %323 = vmatpush1.msra.mxu0 0.0
    %324 = vmatprep.subr.mxu0 0.0
    %325 = vmatpush1.msra.mxu0 0.0
    %326 = vmatprep.subr.mxu0 0.0
    %327 = vmatpush1.msra.mxu0 0.0
    %328 = vmatprep.subr.mxu0 0.0
    %329 = vmatpush1.msra.mxu0 0.0
    %330 = vmatprep.subr.mxu0 0.0
    %331 = vmatpush1.msra.mxu0 0.0
    %332 = vmatprep.subr.mxu0 0.0
    %333 = vmatpush1.msra.mxu0 0.0
    %334 = vmatprep.subr.mxu0 0.0
    %335 = vmatpush1.msra.mxu0 0.0
    %336 = vmatprep.subr.mxu0 0.0
    %337 = vmatpush1.msra.mxu0 0.0
    %338 = vmatprep.subr.mxu0 0.0
    %339 = vmatpush1.msra.mxu0 0.0
    %340 = vmatprep.subr.mxu0 0.0
    %341 = vmatpush1.msra.mxu0 0.0
    %342 = vmatprep.subr.mxu0 0.0
    %343 = vmatpush1.msra.mxu0 0.0
    %344 = vmatprep.subr.mxu0 0.0
    %345 = vmatpush1.msra.mxu0 0.0
    %346 = vmatprep.subr.mxu0 0.0
    %347 = vmatpush1.msra.mxu0 0.0
    %348 = vmatprep.mubr.f32.mxu0 0.0
    %349 = vmatmul.mubr.f32.gmra.mrb[0].mxu0 %v282
    %v350 = vpop.f32.mrb[0].mxu0
    %v351 = vadd.f32 %v28, %v350
    %v352 = vpop.f32.mrb[0].mxu0
    %353 = vdwg.mxu0
    %v354 = vtanh.pop %v351
    %s355 = scalar_lea.vmem %s0, 8
    %v356 = vld [vmem:[%s355] sm:$0x3]
    %358 = vrot.lane.b32.xlu0 %v354, 4
    %v359 = vpop.permute.xlu0 %358
    %v361 = vsel %vm31, %v356, %v359
    %v363 = vsel %vm33, %v361, 0
    %365 = vmatprep.subr.mxu0 0.0
    %366 = vmatpush1.msra.mxu0 %v18
    %367 = vmatprep.subr.mxu0 0.0
    %368 = vmatpush1.msra.mxu0 %v19
    %369 = vmatprep.subr.mxu0 0.0
    %370 = vmatpush1.msra.mxu0 %v20
    %371 = vmatprep.subr.mxu0 0.0
    %372 = vmatpush1.msra.mxu0 %v21
    %373 = vmatprep.subr.mxu0 0.0
    %374 = vmatpush1.msra.mxu0 %v39
    %375 = vmatprep.subr.mxu0 0.0
    %376 = vmatpush1.msra.mxu0 0.0
    %377 = vmatprep.subr.mxu0 0.0
    %378 = vmatpush1.msra.mxu0 0.0
    %379 = vmatprep.subr.mxu0 0.0
    %380 = vmatpush1.msra.mxu0 0.0
    %381 = vmatprep.subr.mxu0 0.0
    %382 = vmatpush1.msra.mxu0 0.0
    %383 = vmatprep.subr.mxu0 0.0
    %384 = vmatpush1.msra.mxu0 0.0
    %385 = vmatprep.subr.mxu0 0.0
    %386 = vmatpush1.msra.mxu0 0.0
    %387 = vmatprep.subr.mxu0 0.0
    %388 = vmatpush1.msra.mxu0 0.0
    %389 = vmatprep.subr.mxu0 0.0
    %390 = vmatpush1.msra.mxu0 0.0
    %391 = vmatprep.subr.mxu0 0.0
    %392 = vmatpush1.msra.mxu0 0.0
    %393 = vmatprep.subr.mxu0 0.0
    %394 = vmatpush1.msra.mxu0 0.0
    %395 = vmatprep.subr.mxu0 0.0
    %396 = vmatpush1.msra.mxu0 0.0
    %397 = vmatprep.subr.mxu0 0.0
    %398 = vmatpush1.msra.mxu0 0.0
    %399 = vmatprep.subr.mxu0 0.0
    %400 = vmatpush1.msra.mxu0 0.0
    %401 = vmatprep.subr.mxu0 0.0
    %402 = vmatpush1.msra.mxu0 0.0
    %403 = vmatprep.subr.mxu0 0.0
    %404 = vmatpush1.msra.mxu0 0.0
    %405 = vmatprep.subr.mxu0 0.0
    %406 = vmatpush1.msra.mxu0 0.0
    %407 = vmatprep.subr.mxu0 0.0
    %408 = vmatpush1.msra.mxu0 0.0
    %409 = vmatprep.subr.mxu0 0.0
    %410 = vmatpush1.msra.mxu0 0.0
    %411 = vmatprep.subr.mxu0 0.0
    %412 = vmatpush1.msra.mxu0 0.0
    %413 = vmatprep.subr.mxu0 0.0
    %414 = vmatpush1.msra.mxu0 0.0
    %415 = vmatprep.subr.mxu0 0.0
    %416 = vmatpush1.msra.mxu0 0.0
    %417 = vmatprep.subr.mxu0 0.0
    %418 = vmatpush1.msra.mxu0 0.0
    %419 = vmatprep.subr.mxu0 0.0
    %420 = vmatpush1.msra.mxu0 0.0
    %421 = vmatprep.subr.mxu0 0.0
    %422 = vmatpush1.msra.mxu0 0.0
    %423 = vmatprep.subr.mxu0 0.0
    %424 = vmatpush1.msra.mxu0 0.0
    %425 = vmatprep.subr.mxu0 0.0
    %426 = vmatpush1.msra.mxu0 0.0
    %427 = vmatprep.subr.mxu0 0.0
    %428 = vmatpush1.msra.mxu0 0.0
    %429 = vmatprep.mubr.f32.mxu0 0.0
    %430 = vmatmul.mubr.f32.gmra.mrb[0].mxu0 %v363
    %v431 = vpop.f32.mrb[0].mxu0
    %v432 = vadd.f32 %v28, %v431
    %v433 = vpop.f32.mrb[0].mxu0
    %434 = vdwg.mxu0
    %v435 = vtanh.pop %v432
    %s436 = scalar_lea.vmem %s0, 10
    %v437 = vld [vmem:[%s436] sm:$0x3]
    %439 = vrot.lane.b32.xlu0 %v435, 4
    %v440 = vpop.permute.xlu0 %439
    %v442 = vsel %vm31, %v437, %v440
    %v444 = vsel %vm33, %v442, 0
    %446 = vmatprep.subr.mxu0 0.0
    %447 = vmatpush1.msra.mxu0 %v18
    %448 = vmatprep.subr.mxu0 0.0
    %449 = vmatpush1.msra.mxu0 %v19
    %450 = vmatprep.subr.mxu0 0.0
    %451 = vmatpush1.msra.mxu0 %v20
    %452 = vmatprep.subr.mxu0 0.0
    %453 = vmatpush1.msra.mxu0 %v21
    %454 = vmatprep.subr.mxu0 0.0
    %455 = vmatpush1.msra.mxu0 %v39
    %456 = vmatprep.subr.mxu0 0.0
    %457 = vmatpush1.msra.mxu0 0.0
    %458 = vmatprep.subr.mxu0 0.0
    %459 = vmatpush1.msra.mxu0 0.0
    %460 = vmatprep.subr.mxu0 0.0
    %461 = vmatpush1.msra.mxu0 0.0
    %462 = vmatprep.subr.mxu0 0.0
    %463 = vmatpush1.msra.mxu0 0.0
    %464 = vmatprep.subr.mxu0 0.0
    %465 = vmatpush1.msra.mxu0 0.0
    %466 = vmatprep.subr.mxu0 0.0
    %467 = vmatpush1.msra.mxu0 0.0
    %468 = vmatprep.subr.mxu0 0.0
    %469 = vmatpush1.msra.mxu0 0.0
    %470 = vmatprep.subr.mxu0 0.0
    %471 = vmatpush1.msra.mxu0 0.0
    %472 = vmatprep.subr.mxu0 0.0
    %473 = vmatpush1.msra.mxu0 0.0
    %474 = vmatprep.subr.mxu0 0.0
    %475 = vmatpush1.msra.mxu0 0.0
    %476 = vmatprep.subr.mxu0 0.0
    %477 = vmatpush1.msra.mxu0 0.0
    %478 = vmatprep.subr.mxu0 0.0
    %479 = vmatpush1.msra.mxu0 0.0
    %480 = vmatprep.subr.mxu0 0.0
    %481 = vmatpush1.msra.mxu0 0.0
    %482 = vmatprep.subr.mxu0 0.0
    %483 = vmatpush1.msra.mxu0 0.0
    %484 = vmatprep.subr.mxu0 0.0
    %485 = vmatpush1.msra.mxu0 0.0
    %486 = vmatprep.subr.mxu0 0.0
    %487 = vmatpush1.msra.mxu0 0.0
    %488 = vmatprep.subr.mxu0 0.0
    %489 = vmatpush1.msra.mxu0 0.0
    %490 = vmatprep.subr.mxu0 0.0
    %491 = vmatpush1.msra.mxu0 0.0
    %492 = vmatprep.subr.mxu0 0.0
    %493 = vmatpush1.msra.mxu0 0.0
    %494 = vmatprep.subr.mxu0 0.0
    %495 = vmatpush1.msra.mxu0 0.0
    %496 = vmatprep.subr.mxu0 0.0
    %497 = vmatpush1.msra.mxu0 0.0
    %498 = vmatprep.subr.mxu0 0.0
    %499 = vmatpush1.msra.mxu0 0.0
    %500 = vmatprep.subr.mxu0 0.0
    %501 = vmatpush1.msra.mxu0 0.0
    %502 = vmatprep.subr.mxu0 0.0
    %503 = vmatpush1.msra.mxu0 0.0
    %504 = vmatprep.subr.mxu0 0.0
    %505 = vmatpush1.msra.mxu0 0.0
    %506 = vmatprep.subr.mxu0 0.0
    %507 = vmatpush1.msra.mxu0 0.0
    %508 = vmatprep.subr.mxu0 0.0
    %509 = vmatpush1.msra.mxu0 0.0
    %510 = vmatprep.mubr.f32.mxu0 0.0
    %511 = vmatmul.mubr.f32.gmra.mrb[0].mxu0 %v444
    %v512 = vpop.f32.mrb[0].mxu0
    %v513 = vadd.f32 %v28, %v512
    %v514 = vpop.f32.mrb[0].mxu0
    %515 = vdwg.mxu0
    %v516 = vtanh.pop %v513
    %s517 = scalar_lea.vmem %s0, 12
    %v518 = vld [vmem:[%s517] sm:$0x3]
    %520 = vrot.lane.b32.xlu0 %v516, 4
    %v521 = vpop.permute.xlu0 %520
    %v523 = vsel %vm31, %v518, %v521
    %v525 = vsel %vm33, %v523, 0
    %527 = vmatprep.subr.mxu0 0.0
    %528 = vmatpush1.msra.mxu0 %v18
    %529 = vmatprep.subr.mxu0 0.0
    %530 = vmatpush1.msra.mxu0 %v19
    %531 = vmatprep.subr.mxu0 0.0
    %532 = vmatpush1.msra.mxu0 %v20
    %533 = vmatprep.subr.mxu0 0.0
    %534 = vmatpush1.msra.mxu0 %v21
    %535 = vmatprep.subr.mxu0 0.0
    %536 = vmatpush1.msra.mxu0 %v39
    %537 = vmatprep.subr.mxu0 0.0
    %538 = vmatpush1.msra.mxu0 0.0
    %539 = vmatprep.subr.mxu0 0.0
    %540 = vmatpush1.msra.mxu0 0.0
    %541 = vmatprep.subr.mxu0 0.0
    %542 = vmatpush1.msra.mxu0 0.0
    %543 = vmatprep.subr.mxu0 0.0
    %544 = vmatpush1.msra.mxu0 0.0
    %545 = vmatprep.subr.mxu0 0.0
    %546 = vmatpush1.msra.mxu0 0.0
    %547 = vmatprep.subr.mxu0 0.0
    %548 = vmatpush1.msra.mxu0 0.0
    %549 = vmatprep.subr.mxu0 0.0
    %550 = vmatpush1.msra.mxu0 0.0
    %551 = vmatprep.subr.mxu0 0.0
    %552 = vmatpush1.msra.mxu0 0.0
    %553 = vmatprep.subr.mxu0 0.0
    %554 = vmatpush1.msra.mxu0 0.0
    %555 = vmatprep.subr.mxu0 0.0
    %556 = vmatpush1.msra.mxu0 0.0
    %557 = vmatprep.subr.mxu0 0.0
    %558 = vmatpush1.msra.mxu0 0.0
    %559 = vmatprep.subr.mxu0 0.0
    %560 = vmatpush1.msra.mxu0 0.0
    %561 = vmatprep.subr.mxu0 0.0
    %562 = vmatpush1.msra.mxu0 0.0
    %563 = vmatprep.subr.mxu0 0.0
    %564 = vmatpush1.msra.mxu0 0.0
    %565 = vmatprep.subr.mxu0 0.0
    %566 = vmatpush1.msra.mxu0 0.0
    %567 = vmatprep.subr.mxu0 0.0
    %568 = vmatpush1.msra.mxu0 0.0
    %569 = vmatprep.subr.mxu0 0.0
    %570 = vmatpush1.msra.mxu0 0.0
    %571 = vmatprep.subr.mxu0 0.0
    %572 = vmatpush1.msra.mxu0 0.0
    %573 = vmatprep.subr.mxu0 0.0
    %574 = vmatpush1.msra.mxu0 0.0
    %575 = vmatprep.subr.mxu0 0.0
    %576 = vmatpush1.msra.mxu0 0.0
    %577 = vmatprep.subr.mxu0 0.0
    %578 = vmatpush1.msra.mxu0 0.0
    %579 = vmatprep.subr.mxu0 0.0
    %580 = vmatpush1.msra.mxu0 0.0
    %581 = vmatprep.subr.mxu0 0.0
    %582 = vmatpush1.msra.mxu0 0.0
    %583 = vmatprep.subr.mxu0 0.0
    %584 = vmatpush1.msra.mxu0 0.0
    %585 = vmatprep.subr.mxu0 0.0
    %586 = vmatpush1.msra.mxu0 0.0
    %587 = vmatprep.subr.mxu0 0.0
    %588 = vmatpush1.msra.mxu0 0.0
    %589 = vmatprep.subr.mxu0 0.0
    %590 = vmatpush1.msra.mxu0 0.0
    %591 = vmatprep.mubr.f32.mxu0 0.0
    %592 = vmatmul.mubr.f32.gmra.mrb[0].mxu0 %v525
    %v593 = vpop.f32.mrb[0].mxu0
    %v594 = vadd.f32 %v28, %v593
    %v595 = vpop.f32.mrb[0].mxu0
    %596 = vdwg.mxu0
    %v597 = vtanh.pop %v594
    %s598 = scalar_lea.vmem %s0, 14
    %v599 = vld [vmem:[%s598] sm:$0x3]
    %601 = vrot.lane.b32.xlu0 %v597, 4
    %v602 = vpop.permute.xlu0 %601
    %v604 = vsel %vm31, %v599, %v602
    %v606 = vsel %vm33, %v604, 0
    %608 = vmatprep.subr.mxu0 0.0
    %609 = vmatpush1.msra.mxu0 %v18
    %610 = vmatprep.subr.mxu0 0.0
    %611 = vmatpush1.msra.mxu0 %v19
    %612 = vmatprep.subr.mxu0 0.0
    %613 = vmatpush1.msra.mxu0 %v20
    %614 = vmatprep.subr.mxu0 0.0
    %615 = vmatpush1.msra.mxu0 %v21
    %616 = vmatprep.subr.mxu0 0.0
    %617 = vmatpush1.msra.mxu0 %v39
    %618 = vmatprep.subr.mxu0 0.0
    %619 = vmatpush1.msra.mxu0 0.0
    %620 = vmatprep.subr.mxu0 0.0
    %621 = vmatpush1.msra.mxu0 0.0
    %622 = vmatprep.subr.mxu0 0.0
    %623 = vmatpush1.msra.mxu0 0.0
    %624 = vmatprep.subr.mxu0 0.0
    %625 = vmatpush1.msra.mxu0 0.0
    %626 = vmatprep.subr.mxu0 0.0
    %627 = vmatpush1.msra.mxu0 0.0
    %628 = vmatprep.subr.mxu0 0.0
    %629 = vmatpush1.msra.mxu0 0.0
    %630 = vmatprep.subr.mxu0 0.0
    %631 = vmatpush1.msra.mxu0 0.0
    %632 = vmatprep.subr.mxu0 0.0
    %633 = vmatpush1.msra.mxu0 0.0
    %634 = vmatprep.subr.mxu0 0.0
    %635 = vmatpush1.msra.mxu0 0.0
    %636 = vmatprep.subr.mxu0 0.0
    %637 = vmatpush1.msra.mxu0 0.0
    %638 = vmatprep.subr.mxu0 0.0
    %639 = vmatpush1.msra.mxu0 0.0
    %640 = vmatprep.subr.mxu0 0.0
    %641 = vmatpush1.msra.mxu0 0.0
    %642 = vmatprep.subr.mxu0 0.0
    %643 = vmatpush1.msra.mxu0 0.0
    %644 = vmatprep.subr.mxu0 0.0
    %645 = vmatpush1.msra.mxu0 0.0
    %646 = vmatprep.subr.mxu0 0.0
    %647 = vmatpush1.msra.mxu0 0.0
    %648 = vmatprep.subr.mxu0 0.0
    %649 = vmatpush1.msra.mxu0 0.0
    %650 = vmatprep.subr.mxu0 0.0
    %651 = vmatpush1.msra.mxu0 0.0
    %652 = vmatprep.subr.mxu0 0.0
    %653 = vmatpush1.msra.mxu0 0.0
    %654 = vmatprep.subr.mxu0 0.0
    %655 = vmatpush1.msra.mxu0 0.0
    %656 = vmatprep.subr.mxu0 0.0
    %657 = vmatpush1.msra.mxu0 0.0
    %658 = vmatprep.subr.mxu0 0.0
    %659 = vmatpush1.msra.mxu0 0.0
    %660 = vmatprep.subr.mxu0 0.0
    %661 = vmatpush1.msra.mxu0 0.0
    %662 = vmatprep.subr.mxu0 0.0
    %663 = vmatpush1.msra.mxu0 0.0
    %664 = vmatprep.subr.mxu0 0.0
    %665 = vmatpush1.msra.mxu0 0.0
    %666 = vmatprep.subr.mxu0 0.0
    %667 = vmatpush1.msra.mxu0 0.0
    %668 = vmatprep.subr.mxu0 0.0
    %669 = vmatpush1.msra.mxu0 0.0
    %670 = vmatprep.subr.mxu0 0.0
    %671 = vmatpush1.msra.mxu0 0.0
    %672 = vmatprep.mubr.f32.mxu0 0.0
    %673 = vmatmul.mubr.f32.gmra.mrb[0].mxu0 %v606
    %v674 = vpop.f32.mrb[0].mxu0
    %v675 = vadd.f32 %v28, %v674
    %v676 = vpop.f32.mrb[0].mxu0
    %677 = vdwg.mxu0
    %v678 = vtanh.pop %v675
    %679 = vrot.lane.b32.xlu0 %v192, 32
    %v680 = vpop.permute.xlu0 %679
    %682 = vrot.lane.b32.xlu0 %v273, 64
    %v683 = vpop.permute.xlu0 %682
    %685 = vrot.lane.b32.xlu0 %v354, 96
    %v686 = vpop.permute.xlu0 %685
    %688 = vrot.lane.b32.xlu0 %v516, 32
    %v689 = vpop.permute.xlu0 %688
    %691 = vrot.lane.b32.xlu0 %v597, 64
    %v692 = vpop.permute.xlu0 %691
    %695 = vrot.lane.b32.xlu0 %v678, 96
    %v696 = vpop.permute.xlu0 %695
    %vm698 = vcmask 261120
    %v699 = vsel %vm698, %v111, %v680
    %vm700 = vcmask 523264
    %v701 = vsel %vm700, %v699, %v683
    %vm702 = vcmask 785408
    %v703 = vsel %vm702, %v701, %v686
    %v704 = vsel %vm698, %v435, %v689
    %v705 = vsel %vm700, %v704, %v692
    %v706 = vsel %vm702, %v705, %v696
    %v709 = vcombine.low %v703, %v706
    %v711 = vunpack.c.l.s4 1983009808
    %v712 = vunpack.c.0.s8 %v711
    %v713 = vlaneseq
    %v714 = vshrl.u32 %v713, 7
    %v715 = vsub.s32 %v712, %v714
    %v716 = vrot.slane %v709, %v715
    %718 = vst [vmem:[#allocation2] sm:$0xf] %v716
    %720 = vrot.lane.b32.xlu0 %v108, 96
    %v721 = vpop.permute.xlu0 %720
    %724 = vrot.lane.b32.xlu0 %v189, 100
    %v725 = vpop.permute.xlu0 %724
    %728 = vrot.lane.b32.xlu0 %v270, 104
    %v729 = vpop.permute.xlu0 %728
    %732 = vrot.lane.b32.xlu0 %v351, 108
    %v733 = vpop.permute.xlu0 %732
    %736 = vrot.lane.b32.xlu0 %v432, 112
    %v737 = vpop.permute.xlu0 %736
    %740 = vrot.lane.b32.xlu0 %v513, 116
    %v741 = vpop.permute.xlu0 %740
    %744 = vrot.lane.b32.xlu0 %v594, 120
    %v745 = vpop.permute.xlu0 %744
    %748 = vrot.lane.b32.xlu0 %v675, 124
    %v749 = vpop.permute.xlu0 %748
    %v751 = vsel %vm31, %v721, %v725
    %vm752 = vcmask 64512
    %v753 = vsel %vm752, %v751, %v729
    %vm754 = vcmask 97280
    %v755 = vsel %vm754, %v753, %v733
    %vm756 = vcmask 130048
    %v757 = vsel %vm756, %v755, %v737
    %vm758 = vcmask 162816
    %v759 = vsel %vm758, %v757, %v741
    %vm760 = vcmask 195584
    %v761 = vsel %vm760, %v759, %v745
    %vm762 = vcmask 228352
    %v763 = vsel %vm762, %v761, %v749
    %vm764 = vcmask 254976
    %765 = vst.msk [vmem:[#allocation4] sm:$0x3] %vm764, %v763
    // Predicated region
    $region14: #{rnn_get_output.1} parent=1 // pred_check
      _
    $region15: #{rnn_get_output.1} parent=1 // pred_check_branch
      %767 = sbr.rel (0) target = $region17
    $region16: #{rnn_get_output.1} parent=1 // pred_region
      %s769 = ssub.s32 64, 64
      %770 = vsyncadd [#allocation3], %s769
      %s772 = sshll.u32 [#allocation2], 4
      %s773 = int_to_ptr.vmem [resolvable:$true] %s772
      %775 = dma.vmem_to_hbm [thread:$0]  %s773, 64, %s3, [#allocation3]
    $region17: #{rnn_get_output.1} parent=1 // pred_fallthru
      _
    // Predicated region
    $region18: #{rnn_get_output.1} parent=1 // pred_check
      _
    $region19: #{rnn_get_output.1} parent=1 // pred_check_branch
      %777 = sbr.rel (0) target = $region21
    $region20: #{rnn_get_output.1} parent=1 // pred_region
      %s779 = ssub.s32 32, 32
      %780 = vsyncadd [#allocation5], %s779
      %s782 = sshll.u32 [#allocation4], 4
      %s783 = int_to_ptr.vmem [resolvable:$true] %s782
      %785 = dma.vmem_to_hbm [thread:$0]  %s783, 32, %s4, [#allocation5]
    $region21: #{rnn_get_output.1} parent=1 // pred_fallthru
      _
    // Predicated region
    $region22: #{rnn_get_output.1} parent=1 // pred_check
      _
    $region23: #{rnn_get_output.1} parent=1 // pred_check_branch
      %787 = sbr.rel (0) target = $region25
    $region24: #{rnn_get_output.1} parent=1 // pred_region
      %788 = dma.done [#allocation3], 64
    $region25: #{rnn_get_output.1} parent=1 // pred_fallthru
      _
    // Predicated region
    $region26: #{rnn_get_output.1} parent=1 // pred_check
      _
    $region27: #{rnn_get_output.1} parent=1 // pred_check_branch
      %790 = sbr.rel (0) target = $region29
    $region28: #{rnn_get_output.1} parent=1 // pred_region
      %791 = dma.done [#allocation5], 32
    $region29: #{rnn_get_output.1} parent=1 // pred_fallthru
      _
    %792 = vsyncpa [#allocation3], 1
    %793 = vsyncpa [#allocation5], 1

</llo_original>
